<compile_context>
chip_gen: v7x
topology: tpu7x:2x2x1
jax: 0.10.0
libtpu: 0.0.40
codegen_flags: <defaults>
</compile_context>

<pallas_src>
import jax
import jax.numpy as jnp
from jax.experimental import pallas as pl
from jax.experimental.pallas import tpu as pltpu


def _make_mlp_kernel(cin, cout, tt, use_vpu_first_layer):
    def kernel(x_ref, w1_ref, b1_ref, w2_ref, b2_ref, o_ref):
        # x_ref : (1, cin, tt)   input tile, tokens on the lane axis
        # w1_ref: (cout, cin)    first Linear weight (PyTorch (out, in) layout)
        # b1_ref: (cout, 1)      f32
        # w2_ref: (cout, cout)   second Linear weight
        # b2_ref: (cout, 1)      f32
        # o_ref : (1, cout, tt)
        x = x_ref[0]                                    # (cin, tt)
        b1 = b1_ref[...]                                # (cout, 1)

        if use_vpu_first_layer:
            # K = cin is tiny: cin broadcast FMAs on the VPU beat an MXU push.
            # Bias folded into the accumulator init.
            h = jnp.broadcast_to(b1, (cout, tt))
            w1 = w1_ref[...].astype(jnp.float32)        # (cout, cin), tiny
            xf = x.astype(jnp.float32)
            for c in range(cin):                        # static, unrolled
                h = h + w1[:, c:c + 1] * xf[c:c + 1, :]
        else:
            h = jnp.dot(w1_ref[...], x.astype(w1_ref.dtype),
                        preferred_element_type=jnp.float32) + b1

        h = h * jax.nn.sigmoid(h)                       # SiLU in f32 (EUP slot)

        y = jnp.dot(w2_ref[...], h.astype(w2_ref.dtype),
                    preferred_element_type=jnp.float32) + b2_ref[...]
        o_ref[0] = y.astype(o_ref.dtype)

    return kernel


def mlp_embedder(x, w1, b1, w2, b2, *, max_token_tile=2048,
                 weight_dtype=jnp.bfloat16):
    """MlpEmbedder forward pass.

    Args:
      x : (b, Cin, ...)   channels-first, like the PyTorch module input.
      w1: (Cout, Cin)     first Linear weight, PyTorch (out, in) layout.
      b1: (Cout,)
      w2: (Cout, Cout)    second Linear weight, PyTorch (out, in) layout.
      b2: (Cout,)
    Returns:
      (b, Cout, ...) channels-first output in x's dtype.
    """
    cout, cin = w1.shape
    assert x.shape[1] == cin, (x.shape, w1.shape)
    b = x.shape[0]
    spatial = x.shape[2:]
    t = 1
    for s in spatial:
        t *= s

    # Flatten trailing dims to a token axis (contiguous reshape, no transpose).
    xf = x.reshape(b, cin, t)

    # Token tiling: one big lane-dense tile per grid step.
    if t <= max_token_tile:
        tt, tp = t, t               # full-extent block: no (8,128) constraint
    else:
        tt = max(128, (max_token_tile // 128) * 128)
        tp = pl.cdiv(t, tt) * tt
    if tp != t:
        # TODO(synk): mask the ragged final tile in-kernel instead of
        # materializing a padded copy of x in HBM.
        xf = jnp.pad(xf, ((0, 0), (0, 0), (0, tp - t)))

    # bf16 weights (precision choice); f32 biases / accumulation / SiLU.
    w1c = w1.astype(weight_dtype)
    w2c = w2.astype(weight_dtype)
    b1r = b1.astype(jnp.float32).reshape(cout, 1)
    b2r = b2.astype(jnp.float32).reshape(cout, 1)

    use_vpu_first_layer = cin <= 8
    kernel = _make_mlp_kernel(cin, cout, tt, use_vpu_first_layer)

    # Rough VMEM budget (double-buffered tiles + resident weights); only raise
    # the scoped limit when the default (16/32 MiB) would be exceeded.
    x_bytes = jnp.dtype(x.dtype).itemsize
    w_bytes = jnp.dtype(weight_dtype).itemsize
    vmem_est = (2 * tt * cin * x_bytes          # x tiles (double-buffered)
                + 2 * tt * cout * x_bytes       # output tiles (double-buffered)
                + 2 * (cin + cout) * cout * w_bytes
                + 4 * cout * 4)
    compiler_kwargs = dict(dimension_semantics=("parallel", "parallel"))
    if vmem_est > 24 * 1024 * 1024:
        # TODO(synk): for very large Cout (e.g. 3072 on v7x's 64 MiB VMEM),
        # tile the output-channel axis of w2 instead of just raising the limit.
        compiler_kwargs["vmem_limit_bytes"] = min(int(vmem_est) * 5 // 4,
                                                  96 * 1024 * 1024)

    out = pl.pallas_call(
        kernel,
        out_shape=jax.ShapeDtypeStruct((b, cout, tp), x.dtype),
        grid=(b, tp // tt),
        in_specs=[
            pl.BlockSpec((1, cin, tt), lambda i, j: (i, 0, j)),   # x tile
            pl.BlockSpec((cout, cin), lambda i, j: (0, 0)),       # w1 (resident)
            pl.BlockSpec((cout, 1), lambda i, j: (0, 0)),         # b1
            pl.BlockSpec((cout, cout), lambda i, j: (0, 0)),      # w2 (resident)
            pl.BlockSpec((cout, 1), lambda i, j: (0, 0)),         # b2
        ],
        out_specs=pl.BlockSpec((1, cout, tt), lambda i, j: (i, 0, j)),
        compiler_params=pltpu.CompilerParams(**compiler_kwargs),
    )(xf, w1c, b1r, w2c, b2r)

    out = out[:, :, :t].reshape((b, cout) + spatial)
    return out


def _reference(x, w1, b1, w2, b2):
    # Pure-f32 reference matching the PyTorch module exactly.
    xt = jnp.swapaxes(x, 1, -1)
    h = xt @ w1.T + b1
    h = h * jax.nn.sigmoid(h)
    y = h @ w2.T + b2
    return jnp.swapaxes(y, 1, -1)


if __name__ == "__main__":
    in_channels = 4
    out_channels = 32
    b, h_dim, w_dim = 2, 16, 16

    key = jax.random.PRNGKey(0)
    kx, k1, kb1, k2, kb2 = jax.random.split(key, 5)

    # PyTorch Linear stores W as (out, in); we keep that layout.
    x = jax.random.normal(kx, (b, in_channels, h_dim, w_dim), dtype=jnp.float32)
    w1 = jax.random.normal(k1, (out_channels, in_channels), jnp.float32) * 0.1
    b1 = jax.random.normal(kb1, (out_channels,), jnp.float32) * 0.1
    w2 = jax.random.normal(k2, (out_channels, out_channels), jnp.float32) * 0.1
    b2 = jax.random.normal(kb2, (out_channels,), jnp.float32) * 0.1

    out = mlp_embedder(x, w1, b1, w2, b2)
    out = jax.block_until_ready(out)

    ref = _reference(x, w1, b1, w2, b2)
    assert out.shape == (b, out_channels, h_dim, w_dim), out.shape
    # bf16 weights in the kernel -> loosened tolerance vs the f32 reference.
    assert jnp.allclose(out, ref, atol=2e-2, rtol=2e-2), float(
        jnp.max(jnp.abs(out - ref)))

    print("KERNEL_OK")
</pallas_src>

<mosaic_0001>
module attributes {stable_mosaic.version = 11 : i64} {
  func.func @kernel(%arg0: i32, %arg1: i32, %arg2: memref<1x4x256xf32, #tpu.memory_space<vmem>>, %arg3: memref<32x4xbf16, #tpu.memory_space<vmem>>, %arg4: memref<32x1xf32, #tpu.memory_space<vmem>>, %arg5: memref<32x32xbf16, #tpu.memory_space<vmem>>, %arg6: memref<32x1xf32, #tpu.memory_space<vmem>>, %arg7: memref<1x32x256xf32, #tpu.memory_space<vmem>>) attributes {dimension_semantics = [#tpu.dimension_semantics<parallel>, #tpu.dimension_semantics<parallel>], iteration_bounds = array<i64: 2, 1>, scalar_prefetch = 0 : i64, scratch_operands = 0 : i64, tpu.core_type = #tpu.core_type<tc>, window_params = [{transform_indices = @transform_0, window_bounds = array<i64: 1, 4, 256>}, {pipeline_mode = #tpu.pipeline_mode<synchronous>, transform_indices = @transform_1, window_bounds = array<i64: 32, 4>}, {pipeline_mode = #tpu.pipeline_mode<synchronous>, transform_indices = @transform_2, window_bounds = array<i64: 32, 1>}, {pipeline_mode = #tpu.pipeline_mode<synchronous>, transform_indices = @transform_3, window_bounds = array<i64: 32, 32>}, {pipeline_mode = #tpu.pipeline_mode<synchronous>, transform_indices = @transform_4, window_bounds = array<i64: 32, 1>}, {transform_indices = @transform_5, window_bounds = array<i64: 1, 32, 256>}]} {
    %c0 = arith.constant 0 : index
    %c0_0 = arith.constant 0 : index
    %c0_1 = arith.constant 0 : index
    %0 = vector.load %arg2[%c0, %c0_0, %c0_1] : memref<1x4x256xf32, #tpu.memory_space<vmem>>, vector<1x4x256xf32>
    %1 = vector.shape_cast %0 : vector<1x4x256xf32> to vector<4x256xf32>
    %c0_2 = arith.constant 0 : index
    %c0_3 = arith.constant 0 : index
    %2 = vector.load %arg4[%c0_2, %c0_3] : memref<32x1xf32, #tpu.memory_space<vmem>>, vector<32x1xf32>
    %3 = vector.shape_cast %2 : vector<32x1xf32> to vector<32x1xf32>
    %4 = vector.broadcast %3 : vector<32x1xf32> to vector<32x256xf32>
    %c0_4 = arith.constant 0 : index
    %c0_5 = arith.constant 0 : index
    %5 = vector.load %arg3[%c0_4, %c0_5] : memref<32x4xbf16, #tpu.memory_space<vmem>>, vector<32x4xbf16>
    %6 = arith.extf %5 : vector<32x4xbf16> to vector<32x4xf32>
    %7 = vector.extract_strided_slice %6 {offsets = [0, 0], sizes = [32, 1], strides = [1, 1]} : vector<32x4xf32> to vector<32x1xf32>
    %8 = vector.extract_strided_slice %1 {offsets = [0, 0], sizes = [1, 256], strides = [1, 1]} : vector<4x256xf32> to vector<1x256xf32>
    %9 = vector.broadcast %7 : vector<32x1xf32> to vector<32x256xf32>
    %10 = vector.broadcast %8 : vector<1x256xf32> to vector<32x256xf32>
    %11 = arith.mulf %9, %10 : vector<32x256xf32>
    %12 = arith.addf %4, %11 : vector<32x256xf32>
    %13 = vector.extract_strided_slice %6 {offsets = [0, 1], sizes = [32, 1], strides = [1, 1]} : vector<32x4xf32> to vector<32x1xf32>
    %14 = vector.extract_strided_slice %1 {offsets = [1, 0], sizes = [1, 256], strides = [1, 1]} : vector<4x256xf32> to vector<1x256xf32>
    %15 = vector.broadcast %13 : vector<32x1xf32> to vector<32x256xf32>
    %16 = vector.broadcast %14 : vector<1x256xf32> to vector<32x256xf32>
    %17 = arith.mulf %15, %16 : vector<32x256xf32>
    %18 = arith.addf %12, %17 : vector<32x256xf32>
    %19 = vector.extract_strided_slice %6 {offsets = [0, 2], sizes = [32, 1], strides = [1, 1]} : vector<32x4xf32> to vector<32x1xf32>
    %20 = vector.extract_strided_slice %1 {offsets = [2, 0], sizes = [1, 256], strides = [1, 1]} : vector<4x256xf32> to vector<1x256xf32>
    %21 = vector.broadcast %19 : vector<32x1xf32> to vector<32x256xf32>
    %22 = vector.broadcast %20 : vector<1x256xf32> to vector<32x256xf32>
    %23 = arith.mulf %21, %22 : vector<32x256xf32>
    %24 = arith.addf %18, %23 : vector<32x256xf32>
    %25 = vector.extract_strided_slice %6 {offsets = [0, 3], sizes = [32, 1], strides = [1, 1]} : vector<32x4xf32> to vector<32x1xf32>
    %26 = vector.extract_strided_slice %1 {offsets = [3, 0], sizes = [1, 256], strides = [1, 1]} : vector<4x256xf32> to vector<1x256xf32>
    %27 = vector.broadcast %25 : vector<32x1xf32> to vector<32x256xf32>
    %28 = vector.broadcast %26 : vector<1x256xf32> to vector<32x256xf32>
    %29 = arith.mulf %27, %28 : vector<32x256xf32>
    %30 = arith.addf %24, %29 : vector<32x256xf32>
    %31 = arith.negf %30 : vector<32x256xf32>
    %32 = math.exp %31 : vector<32x256xf32>
    %cst = arith.constant 1.000000e+00 : f32
    %33 = vector.broadcast %cst : f32 to vector<32x256xf32>
    %34 = arith.addf %33, %32 : vector<32x256xf32>
    %35 = arith.divf %33, %34 : vector<32x256xf32>
    %36 = arith.mulf %30, %35 : vector<32x256xf32>
    %c0_6 = arith.constant 0 : index
    %c0_7 = arith.constant 0 : index
    %37 = vector.load %arg5[%c0_6, %c0_7] : memref<32x32xbf16, #tpu.memory_space<vmem>>, vector<32x32xbf16>
    %38 = arith.truncf %36 : vector<32x256xf32> to vector<32x256xbf16>
    %cst_8 = arith.constant dense<0.000000e+00> : vector<32x256xf32>
    %39 = tpu.matmul %37, %38, %cst_8 {dimension_numbers = #tpu.dot_dimension_numbers<[1], [0], [0], [1], [0, 0, 1, 1], [], []>} : vector<32x32xbf16>, vector<32x256xbf16>, vector<32x256xf32> -> vector<32x256xf32>
    %c0_9 = arith.constant 0 : index
    %c0_10 = arith.constant 0 : index
    %40 = vector.load %arg6[%c0_9, %c0_10] : memref<32x1xf32, #tpu.memory_space<vmem>>, vector<32x1xf32>
    %41 = vector.broadcast %40 : vector<32x1xf32> to vector<32x256xf32>
    %42 = arith.addf %39, %41 : vector<32x256xf32>
    %c0_11 = arith.constant 0 : index
    %c0_12 = arith.constant 0 : index
    %c0_13 = arith.constant 0 : index
    %43 = vector.load %arg7[%c0_11, %c0_12, %c0_13] : memref<1x32x256xf32, #tpu.memory_space<vmem>>, vector<1x32x256xf32>
    %44 = vector.shape_cast %43 : vector<1x32x256xf32> to vector<32x256xf32>
    %45 = vector.shape_cast %42 : vector<32x256xf32> to vector<1x32x256xf32>
    tpu.vector_store %arg7[%c0_11, %c0_12, %c0_13], %45 {strides = array<i32>} : memref<1x32x256xf32, #tpu.memory_space<vmem>>, vector<1x32x256xf32>,
    return
  }
  func.func @transform_0(%arg0: i32, %arg1: i32) -> (i32, i32, i32) {
    %c0_i32 = arith.constant 0 : i32
    %c0_i32_0 = arith.constant 0 : i32
    return %arg0, %c0_i32, %arg1 : i32, i32, i32
  }
  func.func @transform_1(%arg0: i32, %arg1: i32) -> (i32, i32) {
    %c0_i32 = arith.constant 0 : i32
    %c0_i32_0 = arith.constant 0 : i32
    %c0_i32_1 = arith.constant 0 : i32
    return %c0_i32, %c0_i32_0 : i32, i32
  }
  func.func @transform_2(%arg0: i32, %arg1: i32) -> (i32, i32) {
    %c0_i32 = arith.constant 0 : i32
    %c0_i32_0 = arith.constant 0 : i32
    %c0_i32_1 = arith.constant 0 : i32
    return %c0_i32, %c0_i32_0 : i32, i32
  }
  func.func @transform_3(%arg0: i32, %arg1: i32) -> (i32, i32) {
    %c0_i32 = arith.constant 0 : i32
    %c0_i32_0 = arith.constant 0 : i32
    %c0_i32_1 = arith.constant 0 : i32
    return %c0_i32, %c0_i32_0 : i32, i32
  }
  func.func @transform_4(%arg0: i32, %arg1: i32) -> (i32, i32) {
    %c0_i32 = arith.constant 0 : i32
    %c0_i32_0 = arith.constant 0 : i32
    %c0_i32_1 = arith.constant 0 : i32
    return %c0_i32, %c0_i32_0 : i32, i32
  }
  func.func @transform_5(%arg0: i32, %arg1: i32) -> (i32, i32, i32) {
    %c0_i32 = arith.constant 0 : i32
    %c0_i32_0 = arith.constant 0 : i32
    return %arg0, %c0_i32, %arg1 : i32, i32, i32
  }
}

</mosaic_0001>

<llo_original>
// kernel: tpu_custom_call.1
$region0: #{tpu_custom_call.1}
  #allocation0 [shape = 'u32[]', space=smem, size = 0x4, offset = 0x4, fixed_abs, tag = 'smem constant byte address 0x4 - core index']
  #allocation1 [shape = 'u32[144,128]{1,0:T(1,128)}', space=vmem, size = 0x12000, scoped, tag = 'internal scratch']
  %s0 = inlined_call_operand.vmem [shape: f32[2,4,256], index: 0, kind: input, shape index: {}]
  %s1 = inlined_call_operand.vmem [shape: bf16[32,4], index: 1, kind: input, shape index: {}]
  %s2 = inlined_call_operand.vmem [shape: f32[32,1], index: 2, kind: input, shape index: {}]
  %s3 = inlined_call_operand.vmem [shape: bf16[32,32], index: 3, kind: input, shape index: {}]
  %s4 = inlined_call_operand.vmem [shape: f32[32,1], index: 4, kind: input, shape index: {}]
  %s5 = inlined_call_operand.hbm [shape: f32[2,32,256], index: 5, kind: output, shape index: {}]
  %s6 = sld [smem:[#allocation0]]
  $region53: #{tpu_custom_call.1} parent=0
    _
  %s8 = ssub.s32 1, %s6
  %s9 = scalar_select 0, %s8, %s6
  $region1: #{tpu_custom_call.1} parent=0
    #allocation2 [shape = 'u8[65536]{0}', space=vmem, size = 0x10000, scoped, tag = 'output window, operand 0']
    #allocation3 [shape = 's32[2]{0}', space=sflag, size = 0x8, scoped, tag = 'scoped memory for tpu_custom_call.1']
    %10 = vsyncpa [#allocation3], 0
    %s11 = scalar_lea.sflag [#allocation3], 1
    %12 = vsyncpa %s11, 0
    loop: start=0, step=1, limit=4
    $region2: #{tpu_custom_call.1} parent=1 // loop_pre_header
      _
    $region3: #{tpu_custom_call.1} parent=1 // loop_header
      %s14 = sphi 0, %s18
      %p15 = scmp.ge.s32.totalorder %s14, 4
      %s21 = sphi 0, %s33
      %s22 = sphi 0, %s29
      %s23 = sphi 0, %s21
      %s24 = sphi 0, %s22
      %s25 = sphi 0, %s23
      %s26 = sphi 0, %s24
      %s38 = sphi 0, %s40
      %s41 = sphi 0, %s38
      %s42 = sphi 0, %s41
      %s58 = sphi 0, %s42
      %s62 = sphi 0, %s62
      %s64 = sphi 0, %s62
      %s65 = sphi 0, %s64
      %s79 = sphi 0, %s65
      %s83 = sphi 0, %s83
      %s85 = sphi 0, %s83
      %s86 = sphi 0, %s85
      %s100 = sphi 0, %s86
      %s104 = sphi 0, %s104
      %s106 = sphi 0, %s104
      %s107 = sphi 0, %s106
      %s121 = sphi 0, %s107
      %s125 = sphi 0, %s125
      %s127 = sphi 0, %s125
      %s128 = sphi 0, %s127
      %s142 = sphi 0, %s128
      %s150 = sphi 0, %s152
      %s153 = sphi 0, %s150
      %s154 = sphi 0, %s153
      %s170 = sphi 0, %s154
    $region4: #{tpu_custom_call.1} parent=1 // loop_header_branch
      %17 = sbr.rel (%p15) target = $region8
    $region5: #{tpu_custom_call.1} parent=1 // loop_body
      %s19 = ssub.s32 %s14, 1
      %s20 = ssub.s32 %s14, 2
      %s27 = sadd.s32 1, %s22
      %p28 = scmp.ge.s32.totalorder %s27, 1
      %s29 = scalar_select %p28, 0, %s27
      %s30 = sadd.s32 1, %s21
      %s31 = scalar_select %p28, %s30, %s21
      %p32 = scmp.ge.s32.totalorder %s31, 2
      %s33 = scalar_select %p32, 0, %s31
      %s34 = ssub.s32 %s21, %s33
      %s35 = ssub.s32 %s22, %s29
      %s36 = sor.u32 %s34, %s35
      %p37 = scmp.eq.s32.totalorder %s36, 0
      %s39 = sadd.s32 %s38, 1
      %s40 = scalar_select %p37, %s38, %s39
      %p43 = pneg %p37
      %p44 = scmp.eq.s32.totalorder %s14, 1
      %p45 = por %p43, %p44
      %p46 = scmp.ne.s32.totalorder %s38, %s41
      %p47 = scmp.eq.s32.totalorder %s14, 0
      %p48 = por %p46, %p47
      %p49 = scmp.ne.s32.totalorder %s38, %s41
      %p50 = scmp.eq.s32.totalorder %s19, 1
      %p51 = por %p49, %p50
      %p52 = scmp.ne.s32.totalorder %s41, %s42
      %p53 = scmp.eq.s32.totalorder %s19, 0
      %p54 = por %p52, %p53
      %p55 = scmp.ne.s32.totalorder %s41, %s42
      %p56 = scmp.eq.s32.totalorder %s20, 1
      %p57 = por %p55, %p56
      %p59 = scmp.ne.s32.totalorder %s42, %s58
      %p60 = scmp.eq.s32.totalorder %s20, 0
      %p61 = por %p59, %p60
      %s63 = sadd.s32 %s62, 1
      %p66 = scmp.eq.s32.totalorder %s14, 1
      %p67 = scmp.ne.s32.totalorder %s62, %s64
      %p68 = scmp.eq.s32.totalorder %s14, 0
      %p69 = por %p67, %p68
      %p70 = scmp.ne.s32.totalorder %s62, %s64
      %p71 = scmp.eq.s32.totalorder %s19, 1
      %p72 = por %p70, %p71
      %p73 = scmp.ne.s32.totalorder %s64, %s65
      %p74 = scmp.eq.s32.totalorder %s19, 0
      %p75 = por %p73, %p74
      %p76 = scmp.ne.s32.totalorder %s64, %s65
      %p77 = scmp.eq.s32.totalorder %s20, 1
      %p78 = por %p76, %p77
      %p80 = scmp.ne.s32.totalorder %s65, %s79
      %p81 = scmp.eq.s32.totalorder %s20, 0
      %p82 = por %p80, %p81
      %s84 = sadd.s32 %s83, 1
      %p87 = scmp.eq.s32.totalorder %s14, 1
      %p88 = scmp.ne.s32.totalorder %s83, %s85
      %p89 = scmp.eq.s32.totalorder %s14, 0
      %p90 = por %p88, %p89
      %p91 = scmp.ne.s32.totalorder %s83, %s85
      %p92 = scmp.eq.s32.totalorder %s19, 1
      %p93 = por %p91, %p92
      %p94 = scmp.ne.s32.totalorder %s85, %s86
      %p95 = scmp.eq.s32.totalorder %s19, 0
      %p96 = por %p94, %p95
      %p97 = scmp.ne.s32.totalorder %s85, %s86
      %p98 = scmp.eq.s32.totalorder %s20, 1
      %p99 = por %p97, %p98
      %p101 = scmp.ne.s32.totalorder %s86, %s100
      %p102 = scmp.eq.s32.totalorder %s20, 0
      %p103 = por %p101, %p102
      %s105 = sadd.s32 %s104, 1
      %p108 = scmp.eq.s32.totalorder %s14, 1
      %p109 = scmp.ne.s32.totalorder %s104, %s106
      %p110 = scmp.eq.s32.totalorder %s14, 0
      %p111 = por %p109, %p110
      %p112 = scmp.ne.s32.totalorder %s104, %s106
      %p113 = scmp.eq.s32.totalorder %s19, 1
      %p114 = por %p112, %p113
      %p115 = scmp.ne.s32.totalorder %s106, %s107
      %p116 = scmp.eq.s32.totalorder %s19, 0
      %p117 = por %p115, %p116
      %p118 = scmp.ne.s32.totalorder %s106, %s107
      %p119 = scmp.eq.s32.totalorder %s20, 1
      %p120 = por %p118, %p119
      %p122 = scmp.ne.s32.totalorder %s107, %s121
      %p123 = scmp.eq.s32.totalorder %s20, 0
      %p124 = por %p122, %p123
      %s126 = sadd.s32 %s125, 1
      %p129 = scmp.eq.s32.totalorder %s14, 1
      %p130 = scmp.ne.s32.totalorder %s125, %s127
      %p131 = scmp.eq.s32.totalorder %s14, 0
      %p132 = por %p130, %p131
      %p133 = scmp.ne.s32.totalorder %s125, %s127
      %p134 = scmp.eq.s32.totalorder %s19, 1
      %p135 = por %p133, %p134
      %p136 = scmp.ne.s32.totalorder %s127, %s128
      %p137 = scmp.eq.s32.totalorder %s19, 0
      %p138 = por %p136, %p137
      %p139 = scmp.ne.s32.totalorder %s127, %s128
      %p140 = scmp.eq.s32.totalorder %s20, 1
      %p141 = por %p139, %p140
      %p143 = scmp.ne.s32.totalorder %s128, %s142
      %p144 = scmp.eq.s32.totalorder %s20, 0
      %p145 = por %p143, %p144
      %s146 = ssub.s32 %s21, %s33
      %s147 = ssub.s32 %s22, %s29
      %s148 = sor.u32 %s146, %s147
      %p149 = scmp.eq.s32.totalorder %s148, 0
      %s151 = sadd.s32 %s150, 1
      %s152 = scalar_select %p149, %s150, %s151
      %p155 = pneg %p149
      %p156 = scmp.eq.s32.totalorder %s14, 1
      %p157 = por %p155, %p156
      %p158 = scmp.ne.s32.totalorder %s150, %s153
      %p159 = scmp.eq.s32.totalorder %s14, 0
      %p160 = por %p158, %p159
      %p161 = scmp.ne.s32.totalorder %s150, %s153
      %p162 = scmp.eq.s32.totalorder %s19, 1
      %p163 = por %p161, %p162
      %p164 = scmp.ne.s32.totalorder %s153, %s154
      %p165 = scmp.eq.s32.totalorder %s19, 0
      %p166 = por %p164, %p165
      %p167 = scmp.ne.s32.totalorder %s153, %s154
      %p168 = scmp.eq.s32.totalorder %s20, 1
      %p169 = por %p167, %p168
      %p171 = scmp.ne.s32.totalorder %s154, %s170
      %p172 = scmp.eq.s32.totalorder %s20, 0
      %p173 = por %p171, %p172
      %p174 = scmp.le.s32.totalorder 1, %s14
      %p175 = scmp.lt.s32.totalorder %s14, 3
      %p176 = pnand %p174, %p175
      %p177 = pneg %p176
      // Predicated region
      $region9: #{tpu_custom_call.1} parent=5 // pred_check
        _
      $region10: #{tpu_custom_call.1} parent=5 // pred_check_branch
        %179 = sbr.rel (%p176) target = $region12
      $region11: #{tpu_custom_call.1} parent=5 // pred_region
        %s180 = ssub.s32 %s14, 1
        // Predicated region
        $region13: #{tpu_custom_call.1} parent=11 // pred_check
          %p181 = pneg %p75
        $region14: #{tpu_custom_call.1} parent=11 // pred_check_branch
          %183 = sbr.rel (%p181) target = $region16
        $region15: #{tpu_custom_call.1} parent=11 // pred_region
          _
        $region16: #{tpu_custom_call.1} parent=11 // pred_fallthru
          _
        // Predicated region
        $region17: #{tpu_custom_call.1} parent=11 // pred_check
          %p184 = pneg %p96
        $region18: #{tpu_custom_call.1} parent=11 // pred_check_branch
          %186 = sbr.rel (%p184) target = $region20
        $region19: #{tpu_custom_call.1} parent=11 // pred_region
          _
        $region20: #{tpu_custom_call.1} parent=11 // pred_fallthru
          _
        // Predicated region
        $region21: #{tpu_custom_call.1} parent=11 // pred_check
          %p187 = pneg %p117
        $region22: #{tpu_custom_call.1} parent=11 // pred_check_branch
          %189 = sbr.rel (%p187) target = $region24
        $region23: #{tpu_custom_call.1} parent=11 // pred_region
          _
        $region24: #{tpu_custom_call.1} parent=11 // pred_fallthru
          _
        // Predicated region
        $region25: #{tpu_custom_call.1} parent=11 // pred_check
          %p190 = pneg %p138
        $region26: #{tpu_custom_call.1} parent=11 // pred_check_branch
          %192 = sbr.rel (%p190) target = $region28
        $region27: #{tpu_custom_call.1} parent=11 // pred_region
          _
        $region28: #{tpu_custom_call.1} parent=11 // pred_fallthru
          _
      $region12: #{tpu_custom_call.1} parent=5 // pred_fallthru
        _
      %p193 = scmp.lt.s32.totalorder %s14, 2
      // Predicated region
      $region29: #{tpu_custom_call.1} parent=5 // pred_check
        %p194 = pneg %p193
      $region30: #{tpu_custom_call.1} parent=5 // pred_check_branch
        %196 = sbr.rel (%p194) target = $region32
      $region31: #{tpu_custom_call.1} parent=5 // pred_region
        // Predicated region
        $region33: #{tpu_custom_call.1} parent=31 // pred_check
          %p197 = pneg %p48
        $region34: #{tpu_custom_call.1} parent=31 // pred_check_branch
          %199 = sbr.rel (%p197) target = $region36
        $region35: #{tpu_custom_call.1} parent=31 // pred_region
          %s200 = smul.u32 2, %s22
          %p201 = scmp.lt.s32.totalorder %s21, 1
          %s202 = scalar_select %p201, %s21, 1
          %p203 = scmp.lt.s32.totalorder %s200, 1
          %s204 = scalar_select %p203, %s200, 1
          %s205 = smul.addr %s202, 2
          %s206 = sadd.s32 %s204, %s205
          %s207 = smul.addr %s206, 4
          %s208 = scalar_lea.vmem %s0, %s207
          %s209 = smul.u32 2, %s22
        $region36: #{tpu_custom_call.1} parent=31 // pred_fallthru
          _
      $region32: #{tpu_custom_call.1} parent=5 // pred_fallthru
        _
      %p210 = scmp.le.s32.totalorder 1, %s14
      %p211 = scmp.lt.s32.totalorder %s14, 3
      %p212 = pnand %p210, %p211
      %p213 = pneg %p212
      // Predicated region
      $region37: #{tpu_custom_call.1} parent=5 // pred_check
        _
      $region38: #{tpu_custom_call.1} parent=5 // pred_check_branch
        %215 = sbr.rel (%p212) target = $region40
      $region39: #{tpu_custom_call.1} parent=5 // pred_region
        %s216 = ssub.s32 %s14, 1
        %s217 = smul.u32 2, %s24
        %p218 = scmp.lt.s32.totalorder %s23, 1
        %s219 = scalar_select %p218, %s23, 1
        %p220 = scmp.lt.s32.totalorder %s217, 1
        %s221 = scalar_select %p220, %s217, 1
        %s222 = smul.addr %s219, 2
        %s223 = sadd.s32 %s221, %s222
        %s224 = smul.addr %s223, 4
        %s225 = scalar_lea.vmem %s0, %s224
        %p226 = pneg %p54
        %p227 = pneg %p51
        %p228 = pneg %p75
        %p229 = pneg %p72
        %p230 = pneg %p96
        %p231 = pneg %p93
        %p232 = pneg %p117
        %p233 = pneg %p114
        %p234 = pneg %p138
        %p235 = pneg %p135
        %p236 = pneg %p166
        %p237 = pneg %p163
        %s238 = sand.u32 %s153, 1
        %s239 = scalar_lea.sflag [#allocation3], %s238
        %s240 = sand.u32 %s153, 1
        %s241 = smul.addr %s240, 64
        %s242 = scalar_lea.vmem [#allocation2], %s241
        %s243 = smul.u32 2, %s24
        %p244 = scmp.lt.s32.totalorder %s23, 1
        %s245 = scalar_select %p244, %s23, 1
        %p246 = scmp.lt.s32.totalorder %s243, 1
        %s247 = scalar_select %p246, %s243, 1
        %s248 = smul.addr %s245, 2
        %s249 = sadd.s32 %s247, %s248
        %s250 = smul.addr %s249, 4
        %s251 = scalar_lea.vmem %s0, %s250
        %s252 = smul.u32 2, %s24
        %s253 = smul.u32 2, %s24
        %v255 = vld [vmem:[%s251] sm:$0xff]
        %v256 = vld [vmem:[%s2] sm:$0xff]
        %v257 = vld [vmem:[%s2 + $0x8] sm:$0xff]
        %v258 = vld [vmem:[%s2 + $0x10] sm:$0xff]
        %v259 = vld [vmem:[%s2 + $0x18] sm:$0xff]
        %261 = vset.pattern.permute.xlu0 0
        %262 = vperm.xlu0 %261, %v256
        %v263 = vpop.permute.xlu0 %262
        %266 = vset.pattern.permute.xlu0 0
        %267 = vperm.xlu0 %266, %v257
        %v268 = vpop.permute.xlu0 %267
        %271 = vset.pattern.permute.xlu0 0
        %272 = vperm.xlu0 %271, %v258
        %v273 = vpop.permute.xlu0 %272
        %276 = vset.pattern.permute.xlu0 0
        %277 = vperm.xlu0 %276, %v259
        %v278 = vpop.permute.xlu0 %277
        %v280 = vld [vmem:[%s1] sm:$0xf]
        %v281 = vld [vmem:[%s1 + $0x4] sm:$0xf]
        %v282 = vld [vmem:[%s1 + $0x8] sm:$0xf]
        %v283 = vld [vmem:[%s1 + $0xc] sm:$0xf]
        %v284 = vunpack.c.l.bf16 %v280
        %v285 = vunpack.c.l.bf16 %v281
        %v286 = vunpack.c.l.bf16 %v282
        %v287 = vunpack.c.l.bf16 %v283
        %289 = vset.pattern.permute.xlu0 0
        %290 = vperm.xlu0 %289, %v284
        %v291 = vpop.permute.xlu0 %290
        %294 = vset.pattern.permute.xlu0 0
        %295 = vperm.xlu0 %294, %v285
        %v296 = vpop.permute.xlu0 %295
        %299 = vset.pattern.permute.xlu0 0
        %300 = vperm.xlu0 %299, %v286
        %v301 = vpop.permute.xlu0 %300
        %304 = vset.pattern.permute.xlu0 0
        %305 = vperm.xlu0 %304, %v287
        %v306 = vpop.permute.xlu0 %305
        %v309 = vlaneseq
        %v310 = vshrl.u32 %v309, 7
        %v311 = vsub.s32 0, %v310
        %v312 = vrot.slane %v255, %v311
        %v313 = vlaneseq
        %v314 = vshrl.u32 %v313, 7
        %v315 = vsub.s32 4, %v314
        %v316 = vrot.slane %v255, %v315
        %v319 = vlaneseq
        %v320 = vshrl.u32 %v319, 7
        %v321 = vsub.s32 0, %v320
        %v322 = vrot.slane %v312, %v321
        %v323 = vlaneseq
        %v324 = vshrl.u32 %v323, 7
        %v325 = vsub.s32 0, %v324
        %v326 = vrot.slane %v316, %v325
        %v327 = vmul.f32 %v291, %v322
        %v328 = vmul.f32 %v291, %v326
        %v329 = vmul.f32 %v296, %v322
        %v330 = vmul.f32 %v296, %v326
        %v331 = vmul.f32 %v301, %v322
        %v332 = vmul.f32 %v301, %v326
        %v333 = vmul.f32 %v306, %v322
        %v334 = vmul.f32 %v306, %v326
        %v335 = vadd.f32 %v263, %v327
        %v336 = vadd.f32 %v263, %v328
        %v337 = vadd.f32 %v268, %v329
        %v338 = vadd.f32 %v268, %v330
        %v339 = vadd.f32 %v273, %v331
        %v340 = vadd.f32 %v273, %v332
        %v341 = vadd.f32 %v278, %v333
        %v342 = vadd.f32 %v278, %v334
        %343 = vset.pattern.permute.xlu0 1
        %344 = vperm.xlu0 %343, %v284
        %v345 = vpop.permute.xlu0 %344
        %347 = vset.pattern.permute.xlu0 1
        %348 = vperm.xlu0 %347, %v285
        %v349 = vpop.permute.xlu0 %348
        %351 = vset.pattern.permute.xlu0 1
        %352 = vperm.xlu0 %351, %v286
        %v353 = vpop.permute.xlu0 %352
        %355 = vset.pattern.permute.xlu0 1
        %356 = vperm.xlu0 %355, %v287
        %v357 = vpop.permute.xlu0 %356
        %v359 = vlaneseq
        %v360 = vshrl.u32 %v359, 7
        %v361 = vsub.s32 1, %v360
        %v362 = vrot.slane %v255, %v361
        %v363 = vlaneseq
        %v364 = vshrl.u32 %v363, 7
        %v365 = vsub.s32 5, %v364
        %v366 = vrot.slane %v255, %v365
        %v369 = vlaneseq
        %v370 = vshrl.u32 %v369, 7
        %v371 = vsub.s32 1, %v370
        %v372 = vrot.slane %v362, %v371
        %v373 = vlaneseq
        %v374 = vshrl.u32 %v373, 7
        %v375 = vsub.s32 1, %v374
        %v376 = vrot.slane %v366, %v375
        %v377 = vmul.f32 %v345, %v372
        %v378 = vmul.f32 %v345, %v376
        %v379 = vmul.f32 %v349, %v372
        %v380 = vmul.f32 %v349, %v376
        %v381 = vmul.f32 %v353, %v372
        %v382 = vmul.f32 %v353, %v376
        %v383 = vmul.f32 %v357, %v372
        %v384 = vmul.f32 %v357, %v376
        %v385 = vadd.f32 %v335, %v377
        %v386 = vadd.f32 %v336, %v378
        %v387 = vadd.f32 %v337, %v379
        %v388 = vadd.f32 %v338, %v380
        %v389 = vadd.f32 %v339, %v381
        %v390 = vadd.f32 %v340, %v382
        %v391 = vadd.f32 %v341, %v383
        %v392 = vadd.f32 %v342, %v384
        %393 = vset.pattern.permute.xlu0 2
        %394 = vperm.xlu0 %393, %v284
        %v395 = vpop.permute.xlu0 %394
        %397 = vset.pattern.permute.xlu0 2
        %398 = vperm.xlu0 %397, %v285
        %v399 = vpop.permute.xlu0 %398
        %401 = vset.pattern.permute.xlu0 2
        %402 = vperm.xlu0 %401, %v286
        %v403 = vpop.permute.xlu0 %402
        %405 = vset.pattern.permute.xlu0 2
        %406 = vperm.xlu0 %405, %v287
        %v407 = vpop.permute.xlu0 %406
        %v409 = vlaneseq
        %v410 = vshrl.u32 %v409, 7
        %v411 = vsub.s32 2, %v410
        %v412 = vrot.slane %v255, %v411
        %v413 = vlaneseq
        %v414 = vshrl.u32 %v413, 7
        %v415 = vsub.s32 6, %v414
        %v416 = vrot.slane %v255, %v415
        %v419 = vlaneseq
        %v420 = vshrl.u32 %v419, 7
        %v421 = vsub.s32 2, %v420
        %v422 = vrot.slane %v412, %v421
        %v423 = vlaneseq
        %v424 = vshrl.u32 %v423, 7
        %v425 = vsub.s32 2, %v424
        %v426 = vrot.slane %v416, %v425
        %v427 = vmul.f32 %v395, %v422
        %v428 = vmul.f32 %v395, %v426
        %v429 = vmul.f32 %v399, %v422
        %v430 = vmul.f32 %v399, %v426
        %v431 = vmul.f32 %v403, %v422
        %v432 = vmul.f32 %v403, %v426
        %v433 = vmul.f32 %v407, %v422
        %v434 = vmul.f32 %v407, %v426
        %v435 = vadd.f32 %v385, %v427
        %v436 = vadd.f32 %v386, %v428
        %v437 = vadd.f32 %v387, %v429
        %v438 = vadd.f32 %v388, %v430
        %v439 = vadd.f32 %v389, %v431
        %v440 = vadd.f32 %v390, %v432
        %v441 = vadd.f32 %v391, %v433
        %v442 = vadd.f32 %v392, %v434
        %443 = vset.pattern.permute.xlu0 3
        %444 = vperm.xlu0 %443, %v284
        %v445 = vpop.permute.xlu0 %444
        %447 = vset.pattern.permute.xlu0 3
        %448 = vperm.xlu0 %447, %v285
        %v449 = vpop.permute.xlu0 %448
        %451 = vset.pattern.permute.xlu0 3
        %452 = vperm.xlu0 %451, %v286
        %v453 = vpop.permute.xlu0 %452
        %455 = vset.pattern.permute.xlu0 3
        %456 = vperm.xlu0 %455, %v287
        %v457 = vpop.permute.xlu0 %456
        %v459 = vlaneseq
        %v460 = vshrl.u32 %v459, 7
        %v461 = vsub.s32 3, %v460
        %v462 = vrot.slane %v255, %v461
        %v463 = vlaneseq
        %v464 = vshrl.u32 %v463, 7
        %v465 = vsub.s32 7, %v464
        %v466 = vrot.slane %v255, %v465
        %v469 = vlaneseq
        %v470 = vshrl.u32 %v469, 7
        %v471 = vsub.s32 3, %v470
        %v472 = vrot.slane %v462, %v471
        %v473 = vlaneseq
        %v474 = vshrl.u32 %v473, 7
        %v475 = vsub.s32 3, %v474
        %v476 = vrot.slane %v466, %v475
        %v477 = vmul.f32 %v445, %v472
        %v478 = vmul.f32 %v445, %v476
        %v479 = vmul.f32 %v449, %v472
        %v480 = vmul.f32 %v449, %v476
        %v481 = vmul.f32 %v453, %v472
        %v482 = vmul.f32 %v453, %v476
        %v483 = vmul.f32 %v457, %v472
        %v484 = vmul.f32 %v457, %v476
        %v485 = vadd.f32 %v435, %v477
        %v486 = vadd.f32 %v436, %v478
        %v487 = vadd.f32 %v437, %v479
        %v488 = vadd.f32 %v438, %v480
        %v489 = vadd.f32 %v439, %v481
        %v490 = vadd.f32 %v440, %v482
        %v491 = vadd.f32 %v441, %v483
        %v492 = vadd.f32 %v442, %v484
        %v493 = vxor.u32 %v485, 2147483648
        %v494 = vxor.u32 %v486, 2147483648
        %v495 = vxor.u32 %v487, 2147483648
        %v496 = vxor.u32 %v488, 2147483648
        %v497 = vxor.u32 %v489, 2147483648
        %v498 = vxor.u32 %v490, 2147483648
        %v499 = vxor.u32 %v491, 2147483648
        %v500 = vxor.u32 %v492, 2147483648
        %v501 = vmul.f32 %v493, 1.442695
        %v502 = vpow.pop %v501
        %v503 = vmul.f32 %v494, 1.442695
        %v504 = vpow.pop %v503
        %v505 = vmul.f32 %v495, 1.442695
        %v506 = vpow.pop %v505
        %v507 = vmul.f32 %v496, 1.442695
        %v508 = vpow.pop %v507
        %v509 = vmul.f32 %v497, 1.442695
        %v510 = vpow.pop %v509
        %v511 = vmul.f32 %v498, 1.442695
        %v512 = vpow.pop %v511
        %v513 = vmul.f32 %v499, 1.442695
        %v514 = vpow.pop %v513
        %v515 = vmul.f32 %v500, 1.442695
        %v516 = vpow.pop %v515
        %v517 = vadd.f32 %v502, 1.0
        %v518 = vadd.f32 %v504, 1.0
        %v519 = vadd.f32 %v506, 1.0
        %v520 = vadd.f32 %v508, 1.0
        %v521 = vadd.f32 %v510, 1.0
        %v522 = vadd.f32 %v512, 1.0
        %v523 = vadd.f32 %v514, 1.0
        %v524 = vadd.f32 %v516, 1.0
        %v525 = vrcp.pop %v517
        %v526 = vmul.f32 1.0, %v525
        %v527 = vrcp.pop %v518
        %v528 = vmul.f32 1.0, %v527
        %v529 = vrcp.pop %v519
        %v530 = vmul.f32 1.0, %v529
        %v531 = vrcp.pop %v520
        %v532 = vmul.f32 1.0, %v531
        %v533 = vrcp.pop %v521
        %v534 = vmul.f32 1.0, %v533
        %v535 = vrcp.pop %v522
        %v536 = vmul.f32 1.0, %v535
        %v537 = vrcp.pop %v523
        %v538 = vmul.f32 1.0, %v537
        %v539 = vrcp.pop %v524
        %v540 = vmul.f32 1.0, %v539
        %v541 = vmul.f32 %v485, %v526
        %v542 = vmul.f32 %v486, %v528
        %v543 = vmul.f32 %v487, %v530
        %v544 = vmul.f32 %v488, %v532
        %v545 = vmul.f32 %v489, %v534
        %v546 = vmul.f32 %v490, %v536
        %v547 = vmul.f32 %v491, %v538
        %v548 = vmul.f32 %v492, %v540
        %v549 = vld [vmem:[%s3] sm:$0xf]
        %v550 = vld [vmem:[%s3 + $0x4] sm:$0xf]
        %v551 = vld [vmem:[%s3 + $0x8] sm:$0xf]
        %v552 = vld [vmem:[%s3 + $0xc] sm:$0xf]
        %v553 = vpack.c.bf16 %v543, %v541
        %v554 = vpack.c.bf16 %v544, %v542
        %v555 = vpack.c.bf16 %v547, %v545
        %v556 = vpack.c.bf16 %v548, %v546
        %v557 = vld [vmem:[%s4] sm:$0xff]
        %v558 = vld [vmem:[%s4 + $0x8] sm:$0xff]
        %v559 = vld [vmem:[%s4 + $0x10] sm:$0xff]
        %v560 = vld [vmem:[%s4 + $0x18] sm:$0xff]
        %562 = vset.pattern.permute.xlu0 0
        %563 = vperm.xlu0 %562, %v557
        %v564 = vpop.permute.xlu0 %563
        %567 = vset.pattern.permute.xlu0 0
        %568 = vperm.xlu0 %567, %v558
        %v569 = vpop.permute.xlu0 %568
        %572 = vset.pattern.permute.xlu0 0
        %573 = vperm.xlu0 %572, %v559
        %v574 = vpop.permute.xlu0 %573
        %577 = vset.pattern.permute.xlu0 0
        %578 = vperm.xlu0 %577, %v560
        %v579 = vpop.permute.xlu0 %578
        %v585 = vunpack.c.l.b16 %v549
        %v586 = vunpack.c.l.b16 %v550
        %v587 = vunpack.c.l.b16 %v551
        %v588 = vunpack.c.l.b16 %v552
        %v589 = vpack.c.b16 %v586, %v585
        %v590 = vpack.c.b16 %v588, %v587
        %vm591 = vcmask 261120
        %v593 = vsel %vm591, %v589, 0
        %v596 = vsel %vm591, %v590, 0
        %598 = vmatprep.subr.bf16.mxu0 %v554
        %599 = vmatpush1.bf16.msra.mxu0 %v553
        %600 = vmatprep.subr.bf16.mxu0 %v556
        %601 = vmatpush1.bf16.msra.mxu0 %v555
        %602 = vmatprep.subr.bf16.mxu0 0
        %603 = vmatpush1.bf16.msra.mxu0 0
        %604 = vmatprep.subr.bf16.mxu0 0
        %605 = vmatpush1.bf16.msra.mxu0 0
        %606 = vmatprep.subr.bf16.mxu0 0
        %607 = vmatpush1.bf16.msra.mxu0 0
        %608 = vmatprep.subr.bf16.mxu0 0
        %609 = vmatpush1.bf16.msra.mxu0 0
        %610 = vmatprep.subr.bf16.mxu0 0
        %611 = vmatpush1.bf16.msra.mxu0 0
        %612 = vmatprep.subr.bf16.mxu0 0
        %613 = vmatpush1.bf16.msra.mxu0 0
        %614 = vmatprep.subr.bf16.mxu0 0
        %615 = vmatpush1.bf16.msra.mxu0 0
        %616 = vmatprep.subr.bf16.mxu0 0
        %617 = vmatpush1.bf16.msra.mxu0 0
        %618 = vmatprep.subr.bf16.mxu0 0
        %619 = vmatpush1.bf16.msra.mxu0 0
        %620 = vmatprep.subr.bf16.mxu0 0
        %621 = vmatpush1.bf16.msra.mxu0 0
        %622 = vmatprep.subr.bf16.mxu0 0
        %623 = vmatpush1.bf16.msra.mxu0 0
        %624 = vmatprep.subr.bf16.mxu0 0
        %625 = vmatpush1.bf16.msra.mxu0 0
        %626 = vmatprep.subr.bf16.mxu0 0
        %627 = vmatpush1.bf16.msra.mxu0 0
        %628 = vmatprep.subr.bf16.mxu0 0
        %629 = vmatpush1.bf16.msra.mxu0 0
        %630 = vmatprep.mubr.bf16.mxu0 0
        %631 = vmatmul.mubr.bf16.gmra.mrb[0].mxu0 %v593
        %v632 = vpop.f32.mrb[0].mxu0
        %v633 = vadd.f32 %v564, %v632
        %v634 = vpop.f32.mrb[0].mxu0
        %v635 = vadd.f32 %v564, %v634
        %v636 = vpop.f32.mrb[0].mxu0
        %v637 = vadd.f32 %v569, %v636
        %v638 = vpop.f32.mrb[0].mxu0
        %v639 = vadd.f32 %v569, %v638
        %640 = vmatprep.mubr.bf16.mxu0 0
        %641 = vmatmul.mubr.bf16.gmra.mrb[0].mxu0 %v596
        %v642 = vpop.f32.mrb[0].mxu0
        %v643 = vadd.f32 %v574, %v642
        %v644 = vpop.f32.mrb[0].mxu0
        %v645 = vadd.f32 %v574, %v644
        %v646 = vpop.f32.mrb[0].mxu0
        %v647 = vadd.f32 %v579, %v646
        %v648 = vpop.f32.mrb[0].mxu0
        %v649 = vadd.f32 %v579, %v648
        %650 = vdwg.mxu0
        %651 = vst [vmem:[%s242] sm:$0xff] %v633
        %652 = vst [vmem:[%s242 + $0x8] sm:$0xff] %v635
        %653 = vst [vmem:[%s242 + $0x10] sm:$0xff] %v637
        %654 = vst [vmem:[%s242 + $0x18] sm:$0xff] %v639
        %655 = vst [vmem:[%s242 + $0x20] sm:$0xff] %v643
        %656 = vst [vmem:[%s242 + $0x28] sm:$0xff] %v645
        %657 = vst [vmem:[%s242 + $0x30] sm:$0xff] %v647
        %658 = vst [vmem:[%s242 + $0x38] sm:$0xff] %v649
        %s659 = sand.u32 %s153, 1
        %s660 = scalar_lea.sflag [#allocation3], %s659
        %s661 = sand.u32 %s153, 1
        %s662 = smul.addr %s661, 64
        %s663 = scalar_lea.vmem [#allocation2], %s662
        // Predicated region
        $region41: #{tpu_custom_call.1} parent=39 // pred_check
          %p664 = pneg %p163
        $region42: #{tpu_custom_call.1} parent=39 // pred_check_branch
          %666 = sbr.rel (%p664) target = $region44
        $region43: #{tpu_custom_call.1} parent=39 // pred_region
          %s667 = smul.u32 2, %s24
          %s669 = ssub.s32 1024, 1024
          %670 = vsyncadd %s660, %s669
          %s671 = smul.addr %s23, 8
          %s672 = sadd.s32 %s667, %s671
          %s673 = smul.addr %s672, 128
          %s674 = scalar_lea.hbm %s5, %s673
          %s675 = sshll.u32 %s663, 4
          %s676 = int_to_ptr.vmem [resolvable:$true] %s675
          %681 = dma.vmem_to_hbm [thread:$0]  %s676, 1024, %s674, %s660, 256, 256, 16
        $region44: #{tpu_custom_call.1} parent=39 // pred_fallthru
          _
      $region40: #{tpu_custom_call.1} parent=5 // pred_fallthru
        _
      %p682 = scmp.le.s32.totalorder 2, %s14
      // Predicated region
      $region45: #{tpu_custom_call.1} parent=5 // pred_check
        %p683 = pneg %p682
      $region46: #{tpu_custom_call.1} parent=5 // pred_check_branch
        %685 = sbr.rel (%p683) target = $region48
      $region47: #{tpu_custom_call.1} parent=5 // pred_region
        %s686 = ssub.s32 %s14, 2
        // Predicated region
        $region49: #{tpu_custom_call.1} parent=47 // pred_check
          %p687 = pneg %p169
        $region50: #{tpu_custom_call.1} parent=47 // pred_check_branch
          %689 = sbr.rel (%p687) target = $region52
        $region51: #{tpu_custom_call.1} parent=47 // pred_region
          %s690 = sand.u32 %s154, 1
          %s691 = scalar_lea.sflag [#allocation3], %s690
          %s692 = sand.u32 %s154, 1
          %s693 = smul.addr %s692, 64
          %s694 = scalar_lea.vmem [#allocation2], %s693
          %695 = dma.done %s691, 1024
        $region52: #{tpu_custom_call.1} parent=47 // pred_fallthru
          _
      $region48: #{tpu_custom_call.1} parent=5 // pred_fallthru
        _
    $region6: #{tpu_custom_call.1} parent=1 // loop_footer
      %s18 = sadd.s32 1, %s14
    $region7: #{tpu_custom_call.1} parent=1 // loop_footer_branch
      %13 = sbr.rel target = $region3
    $region8: #{tpu_custom_call.1} parent=1 // loop_exit
      _
    %696 = vsyncpa [#allocation3], 1
    %s697 = scalar_lea.sflag [#allocation3], 1
    %698 = vsyncpa %s697, 1

</llo_original>
